<compile_context>
chip_gen: v6e
topology: v6e:2x2x1
jax: 0.10.0
libtpu: 0.0.40
codegen_flags: <defaults>
</compile_context>

<pallas_src>
import functools

import jax
import jax.numpy as jnp
from jax.experimental import pallas as pl
from jax.experimental.pallas import tpu as pltpu

OUT_W = 128  # lane-dense output slab width (keep >= 128 for unmasked vst)


def actor_critic_kernel(x_ref, w_in_ref, b_in_ref, w_hid_ref, b_hid_ref,
                        w_head_ref, b_head_ref, out_ref, *, action_dim):
    A = action_dim
    x = x_ref[...]

    # Fused actor|critic hidden layers (zero blocks keep the branches
    # independent; at H=32 the whole fused chain is a single MXU pass).
    h1 = jnp.tanh(jnp.dot(x, w_in_ref[...],
                          preferred_element_type=jnp.float32) + b_in_ref[...])
    h2 = jnp.tanh(jnp.dot(h1, w_hid_ref[...],
                          preferred_element_type=jnp.float32) + b_hid_ref[...])
    # raw: cols [0, A) = actor pre-softmax logits, col 2A = critic value, rest 0.
    raw = jnp.dot(h2, w_head_ref[...],
                  preferred_element_type=jnp.float32) + b_head_ref[...]

    col = jax.lax.broadcasted_iota(jnp.int32, raw.shape, 1)
    actor_mask = col < A

    # F.softmax over the actor columns only.  Masked lanes are shifted to 0
    # before exp so no inf/NaN ever appears, even transiently.
    m1 = jnp.max(jnp.where(actor_mask, raw, -jnp.inf), axis=1, keepdims=True)
    shifted = jnp.where(actor_mask, raw - m1, 0.0)
    e1 = jnp.where(actor_mask, jnp.exp(shifted), 0.0)
    s1 = jnp.sum(e1, axis=1, keepdims=True)
    pi = e1 * pl.reciprocal(s1)          # softmax(pi_raw); 0 outside actor cols

    # Categorical(logits=pi): normalized logits = pi - logsumexp(pi).
    # pi lies in (0, 1], so exp(pi) cannot overflow -> skip the usual
    # max-shift (saves one XLU lane-reduce + one full-width subtract).
    e2 = jnp.where(actor_mask, jnp.exp(pi), 0.0)
    s2 = jnp.sum(e2, axis=1, keepdims=True)
    lse = jnp.log(s2)
    dist_logits = pi - lse
    # dist.probs == softmax(dist_logits) == softmax(pi): reuse e2 / s2.
    probs = e2 * pl.reciprocal(s2)

    # Pack lane-dense output slab: [logits | probs | value | zeros...].
    out = jnp.where(actor_mask, dist_logits, 0.0)
    out = out + pltpu.roll(probs, shift=A, axis=1)        # probs -> cols [A, 2A)
    out = out + jnp.where(col == 2 * A, raw, 0.0)         # value  -> col 2A
    out_ref[...] = out


def _round_up(n, m):
    return ((n + m - 1) // m) * m


def pack_params(p, state_dim, action_dim, hidden_size):
    """Fuse actor/critic weights into one padded matmul chain (done once).

    NOTE: at hidden_size >= 128 the blockdiag fusion starts costing real MXU
    cycles (2x FLOPs on the hidden layer, >90%-zero head); split back into two
    HxH matmuls inside the kernel in that regime.  Casting these to bfloat16
    would halve weight DMA/VMEM and use the bf16-native MXU on v6e/v7x; kept
    f32 here to hold the 1e-5 tolerance against the f32 reference.
    """
    H, A = hidden_size, action_dim
    assert 2 * A + 1 <= OUT_W, "action_dim too large for single 128-wide slab"
    w_in = jnp.concatenate([p["w1"], p["w5"]], axis=1)            # [S, 2H]
    b_in = jnp.concatenate([p["b1"], p["b5"]], axis=1)            # [1, 2H]
    w_hid = jnp.zeros((2 * H, 2 * H), jnp.float32)
    w_hid = w_hid.at[:H, :H].set(p["w2"]).at[H:, H:].set(p["w6"])  # blockdiag
    b_hid = jnp.concatenate([p["b2"], p["b6"]], axis=1)           # [1, 2H]
    w_head = jnp.zeros((2 * H, OUT_W), jnp.float32)
    w_head = w_head.at[:H, :A].set(p["wpi"])                      # actor logits
    w_head = w_head.at[H:, 2 * A:2 * A + 1].set(p["wv"])          # critic value
    b_head = jnp.zeros((1, OUT_W), jnp.float32)
    b_head = b_head.at[:, :A].set(p["bpi"])
    b_head = b_head.at[:, 2 * A:2 * A + 1].set(p["bv"])
    return dict(w_in=w_in, b_in=b_in, w_hid=w_hid, b_hid=b_hid,
                w_head=w_head, b_head=b_head)


def _choose_batch_tile(B, max_tile_b):
    """Batch tile: multiple of 8 (sublane) and, whenever B > 8, at least two
    grid steps so the "parallel" batch axis actually shards across both v7x
    TensorCores (no effect on single-TC v5e/v6e)."""
    if B <= 8:
        return B                         # single block == full array dim
    tb = _round_up(pl.cdiv(B, 2), 8)     # >= 2 grid steps when possible
    return min(max_tile_b, tb)


def actor_critic_forward(x, packed, action_dim, max_tile_b=1024):
    """Returns the lane-dense (B, 128) output slab:
         cols [0, A)  -> Categorical normalized logits
         cols [A, 2A) -> Categorical probs
         col  2A      -> critic value
    Returning the slab (not 3 pre-sliced arrays) avoids re-reading the freshly
    written HBM buffer multiple times on hot paths; use unpack_outputs()."""
    B, state_dim = x.shape
    A = action_dim

    tb = _choose_batch_tile(B, max_tile_b)
    grid = (pl.cdiv(B, tb),)             # ragged last block: no jnp.pad HBM copy

    # Resident full-array weight/bias blocks (index_map -> (0, 0)); they are
    # tiny, so the default double-buffering of constant blocks is negligible.
    full = lambda arr: pl.BlockSpec(arr.shape, lambda i: (0, 0))
    out = pl.pallas_call(
        functools.partial(actor_critic_kernel, action_dim=A),
        out_shape=jax.ShapeDtypeStruct((B, OUT_W), jnp.float32),
        grid=grid,
        in_specs=[
            pl.BlockSpec((tb, state_dim), lambda i: (i, 0)),
            full(packed["w_in"]), full(packed["b_in"]),
            full(packed["w_hid"]), full(packed["b_hid"]),
            full(packed["w_head"]), full(packed["b_head"]),
        ],
        out_specs=pl.BlockSpec((tb, OUT_W), lambda i: (i, 0)),
        compiler_params=pltpu.CompilerParams(
            dimension_semantics=("parallel",),
            vmem_limit_bytes=32 * 1024 * 1024),
    )(x, packed["w_in"], packed["b_in"], packed["w_hid"], packed["b_hid"],
      packed["w_head"], packed["b_head"])
    return out


def unpack_outputs(slab, action_dim):
    """One contiguous narrow slice of the slab, then cheap sub-slices."""
    A = action_dim
    payload = slab[:, :2 * A + 1]
    return payload[:, :A], payload[:, A:2 * A], payload[:, 2 * A:2 * A + 1]


def init_params(key, state_dim, action_dim, hidden_size):
    """PyTorch-style Linear init: U(-1/sqrt(fan_in), 1/sqrt(fan_in)).
    Weights stored [in, out] (transposed w.r.t. nn.Linear), biases [1, out]."""
    def linear(k, fan_in, fan_out):
        kw, kb = jax.random.split(k)
        bound = 1.0 / jnp.sqrt(jnp.float32(fan_in))
        w = jax.random.uniform(kw, (fan_in, fan_out), jnp.float32, -bound, bound)
        b = jax.random.uniform(kb, (1, fan_out), jnp.float32, -bound, bound)
        return w, b

    keys = jax.random.split(key, 6)
    w1, b1 = linear(keys[0], state_dim, hidden_size)
    w2, b2 = linear(keys[1], hidden_size, hidden_size)
    wpi, bpi = linear(keys[2], hidden_size, action_dim)
    w5, b5 = linear(keys[3], state_dim, hidden_size)
    w6, b6 = linear(keys[4], hidden_size, hidden_size)
    wv, bv = linear(keys[5], hidden_size, 1)
    return dict(w1=w1, b1=b1, w2=w2, b2=b2, wpi=wpi, bpi=bpi,
                w5=w5, b5=b5, w6=w6, b6=b6, wv=wv, bv=bv)


def reference_forward(x, p):
    a = jnp.tanh(x @ p["w1"] + p["b1"])
    a = jnp.tanh(a @ p["w2"] + p["b2"])
    pi = jax.nn.softmax(a @ p["wpi"] + p["bpi"], axis=1)
    dist_logits = pi - jax.scipy.special.logsumexp(pi, axis=1, keepdims=True)
    dist_probs = jax.nn.softmax(dist_logits, axis=1)
    v = jnp.tanh(x @ p["w5"] + p["b5"])
    v = jnp.tanh(v @ p["w6"] + p["b6"])
    value = v @ p["wv"] + p["bv"]
    return dist_logits, dist_probs, value


def _check(batch, state_dim, action_dim, params, packed, key):
    x = jax.random.normal(key, (batch, state_dim), jnp.float32)
    slab = jax.block_until_ready(actor_critic_forward(x, packed, action_dim))
    dist_logits, dist_probs, value = unpack_outputs(slab, action_dim)
    ref_logits, ref_probs, ref_value = reference_forward(x, params)
    assert slab.shape == (batch, OUT_W)
    assert dist_logits.shape == (batch, action_dim)
    assert dist_probs.shape == (batch, action_dim)
    assert value.shape == (batch, 1)
    assert jnp.allclose(dist_logits, ref_logits, atol=1e-5)
    assert jnp.allclose(dist_probs, ref_probs, atol=1e-5)
    assert jnp.allclose(value, ref_value, atol=1e-5)


if __name__ == "__main__":
    key = jax.random.PRNGKey(0)
    k_params, k_x1, k_x2 = jax.random.split(key, 3)

    state_dim, action_dim, hidden_size = 16, 6, 32
    params = init_params(k_params, state_dim, action_dim, hidden_size)
    packed = pack_params(params, state_dim, action_dim, hidden_size)

    # TODO(synk): torch.distributions.Categorical is a host-side distribution
    # object; the kernel emits its normalized logits and probs instead.

    # Single-tile path (B == tile).
    _check(8, state_dim, action_dim, params, packed, k_x1)
    # Multi-step + ragged-last-block path (B=10 -> tile 8, grid 2, 2 valid
    # rows in the last block) exercising the no-pad cdiv grid.
    _check(10, state_dim, action_dim, params, packed, k_x2)

    print("KERNEL_OK")
</pallas_src>

<mosaic_0001>
module attributes {stable_mosaic.version = 11 : i64} {
  func.func @actor_critic_kernel(%arg0: i32, %arg1: memref<8x16xf32, #tpu.memory_space<vmem>>, %arg2: memref<16x64xf32, #tpu.memory_space<vmem>>, %arg3: memref<1x64xf32, #tpu.memory_space<vmem>>, %arg4: memref<64x64xf32, #tpu.memory_space<vmem>>, %arg5: memref<1x64xf32, #tpu.memory_space<vmem>>, %arg6: memref<64x128xf32, #tpu.memory_space<vmem>>, %arg7: memref<1x128xf32, #tpu.memory_space<vmem>>, %arg8: memref<8x128xf32, #tpu.memory_space<vmem>>) attributes {dimension_semantics = [#tpu.dimension_semantics<parallel>], iteration_bounds = array<i64: 1>, scalar_prefetch = 0 : i64, scratch_operands = 0 : i64, tpu.core_type = #tpu.core_type<tc>, window_params = [{transform_indices = @transform_0, window_bounds = array<i64: 8, 16>}, {pipeline_mode = #tpu.pipeline_mode<synchronous>, transform_indices = @transform_1, window_bounds = array<i64: 16, 64>}, {pipeline_mode = #tpu.pipeline_mode<synchronous>, transform_indices = @transform_2, window_bounds = array<i64: 1, 64>}, {pipeline_mode = #tpu.pipeline_mode<synchronous>, transform_indices = @transform_3, window_bounds = array<i64: 64, 64>}, {pipeline_mode = #tpu.pipeline_mode<synchronous>, transform_indices = @transform_4, window_bounds = array<i64: 1, 64>}, {pipeline_mode = #tpu.pipeline_mode<synchronous>, transform_indices = @transform_5, window_bounds = array<i64: 64, 128>}, {pipeline_mode = #tpu.pipeline_mode<synchronous>, transform_indices = @transform_6, window_bounds = array<i64: 1, 128>}, {transform_indices = @transform_7, window_bounds = array<i64: 8, 128>}]} {
    %c0 = arith.constant 0 : index
    %c0_0 = arith.constant 0 : index
    %0 = vector.load %arg1[%c0, %c0_0] : memref<8x16xf32, #tpu.memory_space<vmem>>, vector<8x16xf32>
    %c0_1 = arith.constant 0 : index
    %c0_2 = arith.constant 0 : index
    %1 = vector.load %arg2[%c0_1, %c0_2] : memref<16x64xf32, #tpu.memory_space<vmem>>, vector<16x64xf32>
    %cst = arith.constant dense<0.000000e+00> : vector<8x64xf32>
    %2 = tpu.matmul %0, %1, %cst {dimension_numbers = #tpu.dot_dimension_numbers<[1], [0], [0], [1], [0, 0, 1, 1], [], []>} : vector<8x16xf32>, vector<16x64xf32>, vector<8x64xf32> -> vector<8x64xf32>
    %c0_3 = arith.constant 0 : index
    %c0_4 = arith.constant 0 : index
    %3 = vector.load %arg3[%c0_3, %c0_4] : memref<1x64xf32, #tpu.memory_space<vmem>>, vector<1x64xf32>
    %4 = vector.broadcast %3 : vector<1x64xf32> to vector<8x64xf32>
    %5 = arith.addf %2, %4 : vector<8x64xf32>
    %6 = math.tanh %5 : vector<8x64xf32>
    %c0_5 = arith.constant 0 : index
    %c0_6 = arith.constant 0 : index
    %7 = vector.load %arg4[%c0_5, %c0_6] : memref<64x64xf32, #tpu.memory_space<vmem>>, vector<64x64xf32>
    %cst_7 = arith.constant dense<0.000000e+00> : vector<8x64xf32>
    %8 = tpu.matmul %6, %7, %cst_7 {dimension_numbers = #tpu.dot_dimension_numbers<[1], [0], [0], [1], [0, 0, 1, 1], [], []>} : vector<8x64xf32>, vector<64x64xf32>, vector<8x64xf32> -> vector<8x64xf32>
    %c0_8 = arith.constant 0 : index
    %c0_9 = arith.constant 0 : index
    %9 = vector.load %arg5[%c0_8, %c0_9] : memref<1x64xf32, #tpu.memory_space<vmem>>, vector<1x64xf32>
    %10 = vector.broadcast %9 : vector<1x64xf32> to vector<8x64xf32>
    %11 = arith.addf %8, %10 : vector<8x64xf32>
    %12 = math.tanh %11 : vector<8x64xf32>
    %c0_10 = arith.constant 0 : index
    %c0_11 = arith.constant 0 : index
    %13 = vector.load %arg6[%c0_10, %c0_11] : memref<64x128xf32, #tpu.memory_space<vmem>>, vector<64x128xf32>
    %cst_12 = arith.constant dense<0.000000e+00> : vector<8x128xf32>
    %14 = tpu.matmul %12, %13, %cst_12 {dimension_numbers = #tpu.dot_dimension_numbers<[1], [0], [0], [1], [0, 0, 1, 1], [], []>} : vector<8x64xf32>, vector<64x128xf32>, vector<8x128xf32> -> vector<8x128xf32>
    %c0_13 = arith.constant 0 : index
    %c0_14 = arith.constant 0 : index
    %15 = vector.load %arg7[%c0_13, %c0_14] : memref<1x128xf32, #tpu.memory_space<vmem>>, vector<1x128xf32>
    %16 = vector.broadcast %15 : vector<1x128xf32> to vector<8x128xf32>
    %17 = arith.addf %14, %16 : vector<8x128xf32>
    %18 = tpu.iota {dimensions = array<i32: 1>} : vector<8x128xi32>
    %c6_i32 = arith.constant 6 : i32
    %19 = vector.broadcast %c6_i32 : i32 to vector<8x128xi32>
    %20 = arith.cmpi slt, %18, %19 : vector<8x128xi32>
    %cst_15 = arith.constant 0xFF800000 : f32
    %21 = vector.broadcast %cst_15 : f32 to vector<8x128xf32>
    %22 = arith.select %20, %17, %21 : vector<8x128xi1>, vector<8x128xf32>
    %cst_16 = arith.constant dense<0xFF800000> : vector<8xf32>
    %23 = vector.multi_reduction <maximumf>, %22, %cst_16 [1] : vector<8x128xf32> to vector<8xf32>
    %24 = vector.shape_cast %23 : vector<8xf32> to vector<8x1xf32>
    %25 = vector.broadcast %24 : vector<8x1xf32> to vector<8x128xf32>
    %26 = arith.subf %17, %25 : vector<8x128xf32>
    %cst_17 = arith.constant 0.000000e+00 : f32
    %27 = vector.broadcast %cst_17 : f32 to vector<8x128xf32>
    %28 = arith.select %20, %26, %27 : vector<8x128xi1>, vector<8x128xf32>
    %29 = math.exp %28 : vector<8x128xf32>
    %cst_18 = arith.constant 0.000000e+00 : f32
    %30 = vector.broadcast %cst_18 : f32 to vector<8x128xf32>
    %31 = arith.select %20, %29, %30 : vector<8x128xi1>, vector<8x128xf32>
    %cst_19 = arith.constant dense<0.000000e+00> : vector<8xf32>
    %32 = vector.multi_reduction <add>, %31, %cst_19 [1] : vector<8x128xf32> to vector<8xf32>
    %33 = vector.shape_cast %32 : vector<8xf32> to vector<8x1xf32>
    %34 = tpu.reciprocal %33 : vector<8x1xf32> -> vector<8x1xf32>
    %35 = vector.broadcast %34 : vector<8x1xf32> to vector<8x128xf32>
    %36 = arith.mulf %31, %35 : vector<8x128xf32>
    %37 = math.exp %36 : vector<8x128xf32>
    %cst_20 = arith.constant 0.000000e+00 : f32
    %38 = vector.broadcast %cst_20 : f32 to vector<8x128xf32>
    %39 = arith.select %20, %37, %38 : vector<8x128xi1>, vector<8x128xf32>
    %cst_21 = arith.constant dense<0.000000e+00> : vector<8xf32>
    %40 = vector.multi_reduction <add>, %39, %cst_21 [1] : vector<8x128xf32> to vector<8xf32>
    %41 = vector.shape_cast %40 : vector<8xf32> to vector<8x1xf32>
    %42 = math.log %41 : vector<8x1xf32>
    %43 = vector.broadcast %42 : vector<8x1xf32> to vector<8x128xf32>
    %44 = arith.subf %36, %43 : vector<8x128xf32>
    %45 = tpu.reciprocal %41 : vector<8x1xf32> -> vector<8x1xf32>
    %46 = vector.broadcast %45 : vector<8x1xf32> to vector<8x128xf32>
    %47 = arith.mulf %39, %46 : vector<8x128xf32>
    %cst_22 = arith.constant 0.000000e+00 : f32
    %48 = vector.broadcast %cst_22 : f32 to vector<8x128xf32>
    %49 = arith.select %20, %44, %48 : vector<8x128xi1>, vector<8x128xf32>
    %c6_i32_23 = arith.constant 6 : i32
    %50 = tpu.dynamic_rotate %47 by %c6_i32_23 dim 1 : vector<8x128xf32>, i32 -> vector<8x128xf32>
    %51 = arith.addf %49, %50 : vector<8x128xf32>
    %c12_i32 = arith.constant 12 : i32
    %52 = vector.broadcast %c12_i32 : i32 to vector<8x128xi32>
    %53 = arith.cmpi eq, %18, %52 : vector<8x128xi32>
    %cst_24 = arith.constant 0.000000e+00 : f32
    %54 = vector.broadcast %cst_24 : f32 to vector<8x128xf32>
    %55 = arith.select %53, %17, %54 : vector<8x128xi1>, vector<8x128xf32>
    %56 = arith.addf %51, %55 : vector<8x128xf32>
    %c0_25 = arith.constant 0 : index
    %c0_26 = arith.constant 0 : index
    %57 = vector.load %arg8[%c0_25, %c0_26] : memref<8x128xf32, #tpu.memory_space<vmem>>, vector<8x128xf32>
    tpu.vector_store %arg8[%c0_25, %c0_26], %56 {strides = array<i32>} : memref<8x128xf32, #tpu.memory_space<vmem>>, vector<8x128xf32>,
    return
  }
  func.func @transform_0(%arg0: i32) -> (i32, i32) {
    %c0_i32 = arith.constant 0 : i32
    %c0_i32_0 = arith.constant 0 : i32
    return %arg0, %c0_i32 : i32, i32
  }
  func.func @transform_1(%arg0: i32) -> (i32, i32) {
    %c0_i32 = arith.constant 0 : i32
    %c0_i32_0 = arith.constant 0 : i32
    %c0_i32_1 = arith.constant 0 : i32
    return %c0_i32, %c0_i32_0 : i32, i32
  }
  func.func @transform_2(%arg0: i32) -> (i32, i32) {
    %c0_i32 = arith.constant 0 : i32
    %c0_i32_0 = arith.constant 0 : i32
    %c0_i32_1 = arith.constant 0 : i32
    return %c0_i32, %c0_i32_0 : i32, i32
  }
  func.func @transform_3(%arg0: i32) -> (i32, i32) {
    %c0_i32 = arith.constant 0 : i32
    %c0_i32_0 = arith.constant 0 : i32
    %c0_i32_1 = arith.constant 0 : i32
    return %c0_i32, %c0_i32_0 : i32, i32
  }
  func.func @transform_4(%arg0: i32) -> (i32, i32) {
    %c0_i32 = arith.constant 0 : i32
    %c0_i32_0 = arith.constant 0 : i32
    %c0_i32_1 = arith.constant 0 : i32
    return %c0_i32, %c0_i32_0 : i32, i32
  }
  func.func @transform_5(%arg0: i32) -> (i32, i32) {
    %c0_i32 = arith.constant 0 : i32
    %c0_i32_0 = arith.constant 0 : i32
    %c0_i32_1 = arith.constant 0 : i32
    return %c0_i32, %c0_i32_0 : i32, i32
  }
  func.func @transform_6(%arg0: i32) -> (i32, i32) {
    %c0_i32 = arith.constant 0 : i32
    %c0_i32_0 = arith.constant 0 : i32
    %c0_i32_1 = arith.constant 0 : i32
    return %c0_i32, %c0_i32_0 : i32, i32
  }
  func.func @transform_7(%arg0: i32) -> (i32, i32) {
    %c0_i32 = arith.constant 0 : i32
    %c0_i32_0 = arith.constant 0 : i32
    return %arg0, %c0_i32 : i32, i32
  }
}

</mosaic_0001>

<llo_original>
// kernel: tpu_custom_call.1
$region0: #{tpu_custom_call.1}
  #allocation0 [shape = 'u32[]', space=smem, size = 0x4, offset = 0x4, fixed_abs, tag = 'smem constant byte address 0x4 - core index']
  #allocation1 [shape = 'u32[144,128]{1,0:T(1,128)}', space=vmem, size = 0x12000, scoped, tag = 'internal scratch']
  %s0 = inlined_call_operand.hbm [shape: f32[8,16], index: 0, kind: input, shape index: {}]
  %s1 = inlined_call_operand.hbm [shape: f32[16,64], index: 1, kind: input, shape index: {}]
  %s2 = inlined_call_operand.vmem [shape: f32[1,64], index: 2, kind: input, shape index: {}]
  %s3 = inlined_call_operand.hbm [shape: f32[64,64], index: 3, kind: input, shape index: {}]
  %s4 = inlined_call_operand.vmem [shape: f32[1,64], index: 4, kind: input, shape index: {}]
  %s5 = inlined_call_operand.hbm [shape: f32[64,128], index: 5, kind: input, shape index: {}]
  %s6 = inlined_call_operand.vmem [shape: f32[1,128], index: 6, kind: input, shape index: {}]
  %s7 = inlined_call_operand.hbm [shape: f32[8,128], index: 7, kind: output, shape index: {}]
  %s8 = sld [smem:[#allocation0]]
  $region54: #{tpu_custom_call.1} parent=0
    _
  %s10 = ssub.s32 1, %s8
  %s11 = scalar_select 0, %s10, %s8
  $region1: #{tpu_custom_call.1} parent=0
    #allocation2 [shape = 'u8[4096]{0}', space=vmem, size = 0x1000, scoped, tag = 'input window, operand 0, single buffered']
    #allocation3 [shape = 's32[1]{0}', space=sflag, size = 0x4, scoped, tag = 'scoped memory for tpu_custom_call.1']
    #allocation4 [shape = 's32[1]{0}', space=sflag, size = 0x4, scoped, tag = 'scoped memory for tpu_custom_call.1']
    #allocation5 [shape = 'u8[8192]{0}', space=vmem, size = 0x2000, scoped, tag = 'input window, operand 1, single buffered']
    #allocation6 [shape = 's32[1]{0}', space=sflag, size = 0x4, scoped, tag = 'scoped memory for tpu_custom_call.1']
    #allocation7 [shape = 'u8[32768]{0}', space=vmem, size = 0x8000, scoped, tag = 'input window, operand 3, single buffered']
    #allocation8 [shape = 'u8[32768]{0}', space=vmem, size = 0x8000, scoped, tag = 'input window, operand 5, single buffered']
    #allocation9 [shape = 's32[1]{0}', space=sflag, size = 0x4, scoped, tag = 'scoped memory for tpu_custom_call.1']
    #allocation10 [shape = 'u8[4096]{0}', space=vmem, size = 0x1000, scoped, tag = 'output window, operand 0, single buffered']
    %12 = vsyncpa [#allocation3], 0
    %13 = vsyncpa [#allocation6], 0
    %14 = vsyncpa [#allocation9], 0
    %15 = vsyncpa [#allocation4], 0
    // Predicated region
    $region2: #{tpu_custom_call.1} parent=1 // pred_check
      _
    $region3: #{tpu_custom_call.1} parent=1 // pred_check_branch
      %17 = sbr.rel (0) target = $region5
    $region4: #{tpu_custom_call.1} parent=1 // pred_region
      %s19 = ssub.s32 128, 128
      %20 = vsyncadd [#allocation3], %s19
      %s22 = sshll.u32 [#allocation2], 4
      %s23 = int_to_ptr.vmem [resolvable:$true] %s22
      %25 = dma.hbm_to_vmem [thread:$0]  %s0, 128, %s23, [#allocation3]
    $region5: #{tpu_custom_call.1} parent=1 // pred_fallthru
      _
    // Predicated region
    $region6: #{tpu_custom_call.1} parent=1 // pred_check
      _
    $region7: #{tpu_custom_call.1} parent=1 // pred_check_branch
      %27 = sbr.rel (0) target = $region9
    $region8: #{tpu_custom_call.1} parent=1 // pred_region
      %s29 = ssub.s32 256, 256
      %30 = vsyncadd [#allocation6], %s29
      %s31 = sshll.u32 [#allocation5], 4
      %s32 = int_to_ptr.vmem [resolvable:$true] %s31
      %37 = dma.hbm_to_vmem [thread:$0]  %s1, 256, %s32, [#allocation6], 128, 128, 8
    $region9: #{tpu_custom_call.1} parent=1 // pred_fallthru
      _
    // Predicated region
    $region10: #{tpu_custom_call.1} parent=1 // pred_check
      _
    $region11: #{tpu_custom_call.1} parent=1 // pred_check_branch
      %39 = sbr.rel (0) target = $region13
    $region12: #{tpu_custom_call.1} parent=1 // pred_region
      _
    $region13: #{tpu_custom_call.1} parent=1 // pred_fallthru
      _
    // Predicated region
    $region14: #{tpu_custom_call.1} parent=1 // pred_check
      _
    $region15: #{tpu_custom_call.1} parent=1 // pred_check_branch
      %41 = sbr.rel (0) target = $region17
    $region16: #{tpu_custom_call.1} parent=1 // pred_region
      %s43 = ssub.s32 1024, 1024
      %44 = vsyncadd [#allocation6], %s43
      %s45 = sshll.u32 [#allocation7], 4
      %s46 = int_to_ptr.vmem [resolvable:$true] %s45
      %51 = dma.hbm_to_vmem [thread:$0]  %s3, 1024, %s46, [#allocation6], 128, 128, 8
    $region17: #{tpu_custom_call.1} parent=1 // pred_fallthru
      _
    // Predicated region
    $region18: #{tpu_custom_call.1} parent=1 // pred_check
      _
    $region19: #{tpu_custom_call.1} parent=1 // pred_check_branch
      %53 = sbr.rel (0) target = $region21
    $region20: #{tpu_custom_call.1} parent=1 // pred_region
      _
    $region21: #{tpu_custom_call.1} parent=1 // pred_fallthru
      _
    // Predicated region
    $region22: #{tpu_custom_call.1} parent=1 // pred_check
      _
    $region23: #{tpu_custom_call.1} parent=1 // pred_check_branch
      %55 = sbr.rel (0) target = $region25
    $region24: #{tpu_custom_call.1} parent=1 // pred_region
      %s57 = ssub.s32 1024, 1024
      %58 = vsyncadd [#allocation9], %s57
      %s59 = sshll.u32 [#allocation8], 4
      %s60 = int_to_ptr.vmem [resolvable:$true] %s59
      %65 = dma.hbm_to_vmem [thread:$0]  %s5, 1024, %s60, [#allocation9], 128, 128, 8
    $region25: #{tpu_custom_call.1} parent=1 // pred_fallthru
      _
    // Predicated region
    $region26: #{tpu_custom_call.1} parent=1 // pred_check
      _
    $region27: #{tpu_custom_call.1} parent=1 // pred_check_branch
      %67 = sbr.rel (0) target = $region29
    $region28: #{tpu_custom_call.1} parent=1 // pred_region
      _
    $region29: #{tpu_custom_call.1} parent=1 // pred_fallthru
      _
    // Predicated region
    $region30: #{tpu_custom_call.1} parent=1 // pred_check
      _
    $region31: #{tpu_custom_call.1} parent=1 // pred_check_branch
      %69 = sbr.rel (0) target = $region33
    $region32: #{tpu_custom_call.1} parent=1 // pred_region
      %70 = dma.done [#allocation3], 128
    $region33: #{tpu_custom_call.1} parent=1 // pred_fallthru
      _
    // Predicated region
    $region34: #{tpu_custom_call.1} parent=1 // pred_check
      _
    $region35: #{tpu_custom_call.1} parent=1 // pred_check_branch
      %72 = sbr.rel (0) target = $region37
    $region36: #{tpu_custom_call.1} parent=1 // pred_region
      %73 = dma.done [#allocation6], 256
    $region37: #{tpu_custom_call.1} parent=1 // pred_fallthru
      _
    // Predicated region
    $region38: #{tpu_custom_call.1} parent=1 // pred_check
      _
    $region39: #{tpu_custom_call.1} parent=1 // pred_check_branch
      %75 = sbr.rel (0) target = $region41
    $region40: #{tpu_custom_call.1} parent=1 // pred_region
      %76 = dma.done [#allocation6], 1024
    $region41: #{tpu_custom_call.1} parent=1 // pred_fallthru
      _
    // Predicated region
    $region42: #{tpu_custom_call.1} parent=1 // pred_check
      _
    $region43: #{tpu_custom_call.1} parent=1 // pred_check_branch
      %78 = sbr.rel (0) target = $region45
    $region44: #{tpu_custom_call.1} parent=1 // pred_region
      %79 = dma.done [#allocation9], 1024
    $region45: #{tpu_custom_call.1} parent=1 // pred_fallthru
      _
    %v80 = vld [vmem:[#allocation2] sm:$0xff]
    %v81 = vld [vmem:[#allocation5] sm:$0xff]
    %v82 = vld [vmem:[#allocation5 + $0x8] sm:$0xff]
    %v83 = vld [vmem:[%s2] sm:$0x1]
    %v85 = vlaneseq
    %v86 = vshrl.u32 %v85, 7
    %v87 = vsub.s32 0, %v86
    %v88 = vrot.slane %v83, %v87
    %vm90 = vcmask 130048
    %v92 = vsel %vm90, %v80, 0
    %94 = vmatprep.subr.mxu0 0.0
    %95 = vmatpush1.msra.mxu0 0.0
    %96 = vmatprep.subr.mxu0 0.0
    %97 = vmatpush1.msra.mxu0 0.0
    %98 = vmatprep.subr.mxu0 0.0
    %99 = vmatpush1.msra.mxu0 0.0
    %100 = vmatprep.subr.mxu0 0.0
    %101 = vmatpush1.msra.mxu0 0.0
    %102 = vmatprep.subr.mxu0 0.0
    %103 = vmatpush1.msra.mxu0 0.0
    %104 = vmatprep.subr.mxu0 0.0
    %105 = vmatpush1.msra.mxu0 0.0
    %106 = vmatprep.subr.mxu0 0.0
    %107 = vmatpush1.msra.mxu0 0.0
    %108 = vmatprep.subr.mxu0 0.0
    %109 = vmatpush1.msra.mxu0 0.0
    %110 = vmatprep.subr.mxu0 0.0
    %111 = vmatpush1.msra.mxu0 0.0
    %112 = vmatprep.subr.mxu0 0.0
    %113 = vmatpush1.msra.mxu0 0.0
    %114 = vmatprep.subr.mxu0 0.0
    %115 = vmatpush1.msra.mxu0 0.0
    %116 = vmatprep.subr.mxu0 0.0
    %117 = vmatpush1.msra.mxu0 0.0
    %118 = vmatprep.subr.mxu0 0.0
    %119 = vmatpush1.msra.mxu0 0.0
    %120 = vmatprep.subr.mxu0 0.0
    %121 = vmatpush1.msra.mxu0 0.0
    %122 = vmatprep.subr.mxu0 0.0
    %123 = vmatpush1.msra.mxu0 %v82
    %124 = vmatprep.subr.mxu0 0.0
    %125 = vmatpush1.msra.mxu0 %v81
    %126 = vmatprep.subr.mxu0 0.0
    %127 = vmatpush2.msra.mxu0 0.0
    %128 = vmatprep.subr.mxu0 0.0
    %129 = vmatpush2.msra.mxu0 0.0
    %130 = vmatprep.subr.mxu0 0.0
    %131 = vmatpush2.msra.mxu0 0.0
    %132 = vmatprep.subr.mxu0 0.0
    %133 = vmatpush2.msra.mxu0 0.0
    %134 = vmatprep.subr.mxu0 0.0
    %135 = vmatpush2.msra.mxu0 0.0
    %136 = vmatprep.subr.mxu0 0.0
    %137 = vmatpush2.msra.mxu0 0.0
    %138 = vmatprep.subr.mxu0 0.0
    %139 = vmatpush2.msra.mxu0 0.0
    %140 = vmatprep.subr.mxu0 0.0
    %141 = vmatpush2.msra.mxu0 0.0
    %142 = vmatprep.subr.mxu0 0.0
    %143 = vmatpush2.msra.mxu0 0.0
    %144 = vmatprep.subr.mxu0 0.0
    %145 = vmatpush2.msra.mxu0 0.0
    %146 = vmatprep.subr.mxu0 0.0
    %147 = vmatpush2.msra.mxu0 0.0
    %148 = vmatprep.subr.mxu0 0.0
    %149 = vmatpush2.msra.mxu0 0.0
    %150 = vmatprep.subr.mxu0 0.0
    %151 = vmatpush2.msra.mxu0 0.0
    %152 = vmatprep.subr.mxu0 0.0
    %153 = vmatpush2.msra.mxu0 0.0
    %154 = vmatprep.subr.mxu0 0.0
    %155 = vmatpush2.msra.mxu0 0.0
    %156 = vmatprep.subr.mxu0 0.0
    %157 = vmatpush2.msra.mxu0 0.0
    %158 = vmatprep.mubr.f32.mxu0 0.0
    %159 = vmatmul.mubr.f32.gmra.mxu0 %v92
    %v160 = vpop.f32.mrf.mxu0
    %v161 = vadd.f32 %v88, %v160
    %v162 = vpop.f32.mrf.mxu0
    %163 = vdwg.mxu0
    %v164 = vtanh.pop %v161
    %v165 = vld [vmem:[#allocation7] sm:$0xff]
    %v166 = vld [vmem:[#allocation7 + $0x8] sm:$0xff]
    %v167 = vld [vmem:[#allocation7 + $0x10] sm:$0xff]
    %v168 = vld [vmem:[#allocation7 + $0x18] sm:$0xff]
    %v169 = vld [vmem:[#allocation7 + $0x20] sm:$0xff]
    %v170 = vld [vmem:[#allocation7 + $0x28] sm:$0xff]
    %v171 = vld [vmem:[#allocation7 + $0x30] sm:$0xff]
    %v172 = vld [vmem:[#allocation7 + $0x38] sm:$0xff]
    %v173 = vld [vmem:[%s4] sm:$0x1]
    %v175 = vlaneseq
    %v176 = vshrl.u32 %v175, 7
    %v177 = vsub.s32 0, %v176
    %v178 = vrot.slane %v173, %v177
    %vm180 = vcmask 523264
    %v182 = vsel %vm180, %v164, 0
    %184 = vmatprep.subr.mxu0 0.0
    %185 = vmatpush1.msra.mxu0 0.0
    %186 = vmatprep.subr.mxu0 0.0
    %187 = vmatpush1.msra.mxu0 0.0
    %188 = vmatprep.subr.mxu0 0.0
    %189 = vmatpush1.msra.mxu0 0.0
    %190 = vmatprep.subr.mxu0 0.0
    %191 = vmatpush1.msra.mxu0 0.0
    %192 = vmatprep.subr.mxu0 0.0
    %193 = vmatpush1.msra.mxu0 0.0
    %194 = vmatprep.subr.mxu0 0.0
    %195 = vmatpush1.msra.mxu0 0.0
    %196 = vmatprep.subr.mxu0 0.0
    %197 = vmatpush1.msra.mxu0 0.0
    %198 = vmatprep.subr.mxu0 0.0
    %199 = vmatpush1.msra.mxu0 0.0
    %200 = vmatprep.subr.mxu0 0.0
    %201 = vmatpush1.msra.mxu0 %v172
    %202 = vmatprep.subr.mxu0 0.0
    %203 = vmatpush1.msra.mxu0 %v171
    %204 = vmatprep.subr.mxu0 0.0
    %205 = vmatpush1.msra.mxu0 %v170
    %206 = vmatprep.subr.mxu0 0.0
    %207 = vmatpush1.msra.mxu0 %v169
    %208 = vmatprep.subr.mxu0 0.0
    %209 = vmatpush1.msra.mxu0 %v168
    %210 = vmatprep.subr.mxu0 0.0
    %211 = vmatpush1.msra.mxu0 %v167
    %212 = vmatprep.subr.mxu0 0.0
    %213 = vmatpush1.msra.mxu0 %v166
    %214 = vmatprep.subr.mxu0 0.0
    %215 = vmatpush1.msra.mxu0 %v165
    %216 = vmatprep.subr.mxu0 0.0
    %217 = vmatpush2.msra.mxu0 0.0
    %218 = vmatprep.subr.mxu0 0.0
    %219 = vmatpush2.msra.mxu0 0.0
    %220 = vmatprep.subr.mxu0 0.0
    %221 = vmatpush2.msra.mxu0 0.0
    %222 = vmatprep.subr.mxu0 0.0
    %223 = vmatpush2.msra.mxu0 0.0
    %224 = vmatprep.subr.mxu0 0.0
    %225 = vmatpush2.msra.mxu0 0.0
    %226 = vmatprep.subr.mxu0 0.0
    %227 = vmatpush2.msra.mxu0 0.0
    %228 = vmatprep.subr.mxu0 0.0
    %229 = vmatpush2.msra.mxu0 0.0
    %230 = vmatprep.subr.mxu0 0.0
    %231 = vmatpush2.msra.mxu0 0.0
    %232 = vmatprep.subr.mxu0 0.0
    %233 = vmatpush2.msra.mxu0 0.0
    %234 = vmatprep.subr.mxu0 0.0
    %235 = vmatpush2.msra.mxu0 0.0
    %236 = vmatprep.subr.mxu0 0.0
    %237 = vmatpush2.msra.mxu0 0.0
    %238 = vmatprep.subr.mxu0 0.0
    %239 = vmatpush2.msra.mxu0 0.0
    %240 = vmatprep.subr.mxu0 0.0
    %241 = vmatpush2.msra.mxu0 0.0
    %242 = vmatprep.subr.mxu0 0.0
    %243 = vmatpush2.msra.mxu0 0.0
    %244 = vmatprep.subr.mxu0 0.0
    %245 = vmatpush2.msra.mxu0 0.0
    %246 = vmatprep.subr.mxu0 0.0
    %247 = vmatpush2.msra.mxu0 0.0
    %248 = vmatprep.mubr.f32.mxu0 0.0
    %249 = vmatmul.mubr.f32.gmra.mxu0 %v182
    %v250 = vpop.f32.mrf.mxu0
    %v251 = vadd.f32 %v178, %v250
    %v252 = vpop.f32.mrf.mxu0
    %253 = vdwg.mxu0
    %v254 = vtanh.pop %v251
    %v255 = vld [vmem:[#allocation8] sm:$0xff]
    %v256 = vld [vmem:[#allocation8 + $0x8] sm:$0xff]
    %v257 = vld [vmem:[#allocation8 + $0x10] sm:$0xff]
    %v258 = vld [vmem:[#allocation8 + $0x18] sm:$0xff]
    %v259 = vld [vmem:[#allocation8 + $0x20] sm:$0xff]
    %v260 = vld [vmem:[#allocation8 + $0x28] sm:$0xff]
    %v261 = vld [vmem:[#allocation8 + $0x30] sm:$0xff]
    %v262 = vld [vmem:[#allocation8 + $0x38] sm:$0xff]
    %v263 = vld [vmem:[%s6] sm:$0x1]
    %v265 = vlaneseq
    %v266 = vshrl.u32 %v265, 7
    %v267 = vsub.s32 0, %v266
    %v268 = vrot.slane %v263, %v267
    %v271 = vsel %vm180, %v254, 0
    %273 = vmatprep.subr.mxu0 0.0
    %274 = vmatpush1.msra.mxu0 0.0
    %275 = vmatprep.subr.mxu0 0.0
    %276 = vmatpush1.msra.mxu0 0.0
    %277 = vmatprep.subr.mxu0 0.0
    %278 = vmatpush1.msra.mxu0 0.0
    %279 = vmatprep.subr.mxu0 0.0
    %280 = vmatpush1.msra.mxu0 0.0
    %281 = vmatprep.subr.mxu0 0.0
    %282 = vmatpush1.msra.mxu0 0.0
    %283 = vmatprep.subr.mxu0 0.0
    %284 = vmatpush1.msra.mxu0 0.0
    %285 = vmatprep.subr.mxu0 0.0
    %286 = vmatpush1.msra.mxu0 0.0
    %287 = vmatprep.subr.mxu0 0.0
    %288 = vmatpush1.msra.mxu0 0.0
    %289 = vmatprep.subr.mxu0 0.0
    %290 = vmatpush1.msra.mxu0 %v262
    %291 = vmatprep.subr.mxu0 0.0
    %292 = vmatpush1.msra.mxu0 %v261
    %293 = vmatprep.subr.mxu0 0.0
    %294 = vmatpush1.msra.mxu0 %v260
    %295 = vmatprep.subr.mxu0 0.0
    %296 = vmatpush1.msra.mxu0 %v259
    %297 = vmatprep.subr.mxu0 0.0
    %298 = vmatpush1.msra.mxu0 %v258
    %299 = vmatprep.subr.mxu0 0.0
    %300 = vmatpush1.msra.mxu0 %v257
    %301 = vmatprep.subr.mxu0 0.0
    %302 = vmatpush1.msra.mxu0 %v256
    %303 = vmatprep.subr.mxu0 0.0
    %304 = vmatpush1.msra.mxu0 %v255
    %305 = vmatprep.subr.mxu0 0.0
    %306 = vmatpush2.msra.mxu0 0.0
    %307 = vmatprep.subr.mxu0 0.0
    %308 = vmatpush2.msra.mxu0 0.0
    %309 = vmatprep.subr.mxu0 0.0
    %310 = vmatpush2.msra.mxu0 0.0
    %311 = vmatprep.subr.mxu0 0.0
    %312 = vmatpush2.msra.mxu0 0.0
    %313 = vmatprep.subr.mxu0 0.0
    %314 = vmatpush2.msra.mxu0 0.0
    %315 = vmatprep.subr.mxu0 0.0
    %316 = vmatpush2.msra.mxu0 0.0
    %317 = vmatprep.subr.mxu0 0.0
    %318 = vmatpush2.msra.mxu0 0.0
    %319 = vmatprep.subr.mxu0 0.0
    %320 = vmatpush2.msra.mxu0 0.0
    %321 = vmatprep.subr.mxu0 0.0
    %322 = vmatpush2.msra.mxu0 0.0
    %323 = vmatprep.subr.mxu0 0.0
    %324 = vmatpush2.msra.mxu0 0.0
    %325 = vmatprep.subr.mxu0 0.0
    %326 = vmatpush2.msra.mxu0 0.0
    %327 = vmatprep.subr.mxu0 0.0
    %328 = vmatpush2.msra.mxu0 0.0
    %329 = vmatprep.subr.mxu0 0.0
    %330 = vmatpush2.msra.mxu0 0.0
    %331 = vmatprep.subr.mxu0 0.0
    %332 = vmatpush2.msra.mxu0 0.0
    %333 = vmatprep.subr.mxu0 0.0
    %334 = vmatpush2.msra.mxu0 0.0
    %335 = vmatprep.subr.mxu0 0.0
    %336 = vmatpush2.msra.mxu0 0.0
    %337 = vmatprep.mubr.f32.mxu0 0.0
    %338 = vmatmul.mubr.f32.gmra.mxu0 %v271
    %v339 = vpop.f32.mrf.mxu0
    %v340 = vadd.f32 %v268, %v339
    %v341 = vpop.f32.mrf.mxu0
    %342 = vdwg.mxu0
    %v343 = vlaneseq
    %v344 = vand.u32 %v343, 127
    %vm345 = vcmp.lt.s32.totalorder %v344, 6
    %v346 = vsel %vm345, %v340, -inf
    %347 = vmax.xlane.f32.xlu0 %v346
    %v348 = vpop.xlane.xlu0 %347
    %v349 = vsub.f32 %v340, %v348
    %v350 = vsel %vm345, %v349, 0.0
    %v351 = vmul.f32 %v350, 1.442695
    %v352 = vpow.pop %v351
    %v353 = vsel %vm345, %v352, 0.0
    %354 = vadd.xlane.f32.xlu0 %v353
    %v355 = vpop.xlane.xlu0 %354
    %v356 = vrcp.pop %v355
    %v357 = vmul.f32 %v353, %v356
    %v358 = vmul.f32 %v357, 1.442695
    %v359 = vpow.pop %v358
    %v360 = vsel %vm345, %v359, 0.0
    %361 = vadd.xlane.f32.xlu0 %v360
    %v362 = vpop.xlane.xlu0 %361
    %v363 = vlog2.pop %v362
    %v364 = vmul.f32 %v363, 0.6931472
    %v365 = vsub.f32 %v357, %v364
    %v366 = vrcp.pop %v362
    %v367 = vmul.f32 %v360, %v366
    %v368 = vsel %vm345, %v365, 0.0
    %369 = vrot.lane.b32.xlu0 %v367, 6
    %v370 = vpop.permute.xlu0 %369
    %v371 = vadd.f32 %v368, %v370
    %vm372 = vcmp.eq.s32.totalorder %v344, 12
    %v373 = vsel %vm372, %v340, 0.0
    %v374 = vadd.f32 %v371, %v373
    %375 = vst [vmem:[#allocation10] sm:$0xff] %v374
    // Predicated region
    $region46: #{tpu_custom_call.1} parent=1 // pred_check
      _
    $region47: #{tpu_custom_call.1} parent=1 // pred_check_branch
      %377 = sbr.rel (0) target = $region49
    $region48: #{tpu_custom_call.1} parent=1 // pred_region
      %s379 = ssub.s32 128, 128
      %380 = vsyncadd [#allocation4], %s379
      %s382 = sshll.u32 [#allocation10], 4
      %s383 = int_to_ptr.vmem [resolvable:$true] %s382
      %385 = dma.vmem_to_hbm [thread:$0]  %s383, 128, %s7, [#allocation4]
    $region49: #{tpu_custom_call.1} parent=1 // pred_fallthru
      _
    // Predicated region
    $region50: #{tpu_custom_call.1} parent=1 // pred_check
      _
    $region51: #{tpu_custom_call.1} parent=1 // pred_check_branch
      %387 = sbr.rel (0) target = $region53
    $region52: #{tpu_custom_call.1} parent=1 // pred_region
      %388 = dma.done [#allocation4], 128
    $region53: #{tpu_custom_call.1} parent=1 // pred_fallthru
      _
    %389 = vsyncpa [#allocation3], 1
    %390 = vsyncpa [#allocation6], 1
    %391 = vsyncpa [#allocation9], 1
    %392 = vsyncpa [#allocation4], 1

</llo_original>
